<compile_context>
chip_gen: v5e
topology: v5e:2x2
jax: 0.10.0
libtpu: 0.0.40
codegen_flags: <defaults>
</compile_context>

<pallas_src>
import jax
import jax.numpy as jnp
from jax.experimental import pallas as pl
from jax.experimental.pallas import tpu as pltpu

LANES = 128
SUBLANES = 8
TILE_BYTES = 4 * 1024 * 1024     # per-input, per-pipeline-buffer DMA tile target
SUB_ROWS_MAX = 1024              # in-kernel compute chunk (bounds f32 temp VMEM)


def _round_up(x, m):
    return ((x + m - 1) // m) * m


def _num_tensorcores():
    """2 for dual-TensorCore ('megacore') chips, 1 for single-core chips."""
    try:
        kind = jax.devices()[0].device_kind.lower()
    except Exception:
        return 2
    if any(tag in kind for tag in ("v2", "v3", "v5 lite", "v5e", "v6 lite", "v6e")):
        return 1
    return 2


def _plan_tiles(n, itemsize):
    """Pick (tile_rows, rows_padded, pad_elems) for the lane-dense (rows, 128) slab.

    Prefers tilings that need NO pad copy (pure bitcast reshape); falls back to a
    single jnp.pad copy only for misaligned sizes.
    """
    cap = max(SUBLANES, (TILE_BYTES // (LANES * itemsize)) // SUBLANES * SUBLANES)
    if n % LANES == 0:
        rows = n // LANES
        if rows % SUBLANES == 0:
            if rows <= cap:
                return rows, rows, 0               # one exact tile, zero copy
            for t in (cap, cap // 2, cap // 4, cap // 8):
                if t >= SUBLANES and rows % t == 0:
                    return t, rows, 0              # exact tiling, zero copy
    # Fallback: one pad copy (unavoidable for misaligned sizes).
    rows = pl.cdiv(n, LANES)
    tile_rows = min(cap, _round_up(rows, SUBLANES))
    rows_padded = _round_up(rows, tile_rows)
    return tile_rows, rows_padded, rows_padded * LANES - n


def _pick_sub_rows(tile_rows):
    """Largest multiple-of-8 divisor of tile_rows that is <= SUB_ROWS_MAX."""
    sub = min(SUB_ROWS_MAX, tile_rows)
    while tile_rows % sub:
        sub -= SUBLANES
    return sub


def _make_kernel(tile_rows, sub_rows, acc_rows, tiles_per_part, n_tiles, guard):
    n_sub = tile_rows // sub_rows
    groups = sub_rows // acc_rows

    def accumulate(q_ref, scores_ref, thetas_ref, out_ref):
        q_lo = q_ref[0]      # scalars prefetched into SMEM
        q_hi = q_ref[1]

        def step(i, acc):
            r0 = pl.multiple_of(i * sub_rows, sub_rows)
            # Upcast inside the kernel (bf16 inputs stream half the HBM bytes).
            x = scores_ref[pl.ds(r0, sub_rows), :].astype(jnp.float32)
            th = thetas_ref[pl.ds(r0, sub_rows), :].astype(jnp.float32)
            # y_target folded into a select; numerically stable BCE-with-logits.
            in_range = (th >= q_lo) & (th <= q_hi)
            bce = (jnp.maximum(x, 0.0)
                   - jnp.where(in_range, x, 0.0)
                   + jnp.log1p(jnp.exp(-jnp.abs(x))))
            # Partial reduce only over the vreg-major axis into `acc_rows` rows:
            # acc_rows//8 independent vreg accumulation chains (no XLU work here).
            return acc + jnp.sum(bce.reshape(groups, acc_rows, LANES), axis=0)

        acc = jax.lax.fori_loop(
            0, n_sub, step, jnp.zeros((acc_rows, LANES), jnp.float32))
        out_ref[...] += acc

    def kernel(q_ref, scores_ref, thetas_ref, out_ref):
        t = pl.program_id(1)

        # Zero the resident accumulator block at the start of the reduction pass.
        @pl.when(t == 0)
        def _():
            out_ref[...] = jnp.zeros_like(out_ref)

        if guard:
            # Grid rounded up to n_parts; duplicated (clamped) tiles are skipped.
            p = pl.program_id(0)

            @pl.when(p * tiles_per_part + t < n_tiles)
            def _():
                accumulate(q_ref, scores_ref, thetas_ref, out_ref)
        else:
            accumulate(q_ref, scores_ref, thetas_ref, out_ref)

    return kernel


def loss_function_classification(scores, thetas):
    """JAX/Pallas equivalent of LossFunctionClassification.forward((scores, thetas))."""
    assert scores.shape == thetas.shape
    n = int(scores.size)
    assert n > 0

    # q = quantile(thetas.flatten(), [0.25, 0.75]) -- needs a global sort.
    # TODO(synk): the O(n log n) sort dominates end-to-end for large n; a
    # partition/histogram-based rank selection would be cheaper but has no clean
    # Pallas lowering, so it stays in plain JAX (jnp.quantile's default 'linear'
    # interpolation matches torch.quantile).
    quantile_width = 0.5
    qs = jnp.array([0.5 - quantile_width / 2, 0.5 + quantile_width / 2], jnp.float32)
    theta_quantiles = jnp.quantile(thetas.astype(jnp.float32), qs).astype(jnp.float32)

    itemsize = jnp.dtype(scores.dtype).itemsize
    tile_rows, rows_padded, pad = _plan_tiles(n, itemsize)
    n_tiles = rows_padded // tile_rows
    n_parts = _num_tensorcores() if n_tiles > 1 else 1
    tiles_per_part = pl.cdiv(n_tiles, n_parts)
    exact_cover = (n_parts * tiles_per_part == n_tiles)
    sub_rows = _pick_sub_rows(tile_rows)
    acc_rows = 64 if sub_rows % 64 == 0 else SUBLANES

    # Lane-dense (rows, 128) slab. Aligned sizes reshape for free (bitcast);
    # misaligned sizes pay ONE pad copy. Padding scores with -inf and thetas with
    # +inf makes every padded element contribute exactly 0, so no mask is needed.
    def to_slab(a, pad_value):
        flat = a.reshape(-1)
        if pad:
            flat = jnp.pad(flat, (0, pad), constant_values=pad_value)
        return flat.reshape(rows_padded, LANES)

    scores_slab = to_slab(scores, -jnp.inf)
    thetas_slab = to_slab(thetas, jnp.inf)

    if exact_cover:
        def in_map(p, t, q):
            return (p * tiles_per_part + t, 0)
    else:
        # Never emit an out-of-range block index; duplicated tiles get skipped
        # inside the kernel via pl.when.
        def in_map(p, t, q):
            return (jnp.minimum(p * tiles_per_part + t, n_tiles - 1), 0)

    grid_spec = pltpu.PrefetchScalarGridSpec(
        num_scalar_prefetch=1,                     # quantile pair -> SMEM
        grid=(n_parts, tiles_per_part),
        in_specs=[pl.BlockSpec((tile_rows, LANES), in_map),
                  pl.BlockSpec((tile_rows, LANES), in_map)],
        out_specs=pl.BlockSpec((acc_rows, LANES), lambda p, t, q: (p, 0)),
    )

    kernel = _make_kernel(tile_rows, sub_rows, acc_rows, tiles_per_part,
                          n_tiles, not exact_cover)

    # Explicit scoped-VMEM budget: 2 inputs x 2 pipeline buffers x tile bytes,
    # plus headroom for the sub-chunk f32 temporaries and the accumulator.
    vmem_limit = max(4 * tile_rows * LANES * itemsize + (12 << 20), 32 << 20)

    cost = pl.CostEstimate(
        flops=6 * n,
        transcendentals=2 * n,
        bytes_accessed=2 * rows_padded * LANES * itemsize
                       + n_parts * acc_rows * LANES * 4,
    )

    partials = pl.pallas_call(
        kernel,
        out_shape=jax.ShapeDtypeStruct((n_parts * acc_rows, LANES), jnp.float32),
        grid_spec=grid_spec,
        compiler_params=pltpu.CompilerParams(
            dimension_semantics=("parallel", "arbitrary"),
            vmem_limit_bytes=int(vmem_limit)),
        cost_estimate=cost,
    )(theta_quantiles, scores_slab, thetas_slab)

    # Single tiny cross-lane reduce + mean normalization outside the hot loop.
    return jnp.sum(partials) / n


def _reference_loss(scores, thetas):
    """Pure-JAX reference mirroring the PyTorch module."""
    quantile_width = 0.5
    qs = jnp.array([0.5 - quantile_width / 2, 0.5 + quantile_width / 2], jnp.float32)
    tq = jnp.quantile(thetas.astype(jnp.float32), qs)
    y = jnp.where((thetas >= tq[0]) & (thetas <= tq[1]), 1.0, 0.0)
    x = scores.astype(jnp.float32)
    bce = jnp.maximum(x, 0.0) - x * y + jnp.log1p(jnp.exp(-jnp.abs(x)))
    return jnp.mean(bce)


if __name__ == "__main__":
    key = jax.random.PRNGKey(0)
    k1, k2, k3, k4 = jax.random.split(key, 4)

    # Misaligned shape (exercises the pad fallback: n % 128 != 0).
    B, N = 4, 300
    scores = jax.random.normal(k1, (B, N), dtype=jnp.float32)
    thetas = jax.random.normal(k2, (B, N), dtype=jnp.float32)
    loss = jax.block_until_ready(loss_function_classification(scores, thetas))
    ref = _reference_loss(scores, thetas)
    assert jnp.isfinite(loss), "loss is not finite"
    assert jnp.allclose(loss, ref, rtol=1e-5, atol=1e-5), (loss, ref)

    # Aligned shape (exercises the zero-copy bitcast path).
    scores2 = jax.random.normal(k3, (8, 1024), dtype=jnp.float32)
    thetas2 = jax.random.normal(k4, (8, 1024), dtype=jnp.float32)
    loss2 = jax.block_until_ready(loss_function_classification(scores2, thetas2))
    ref2 = _reference_loss(scores2, thetas2)
    assert jnp.isfinite(loss2), "loss2 is not finite"
    assert jnp.allclose(loss2, ref2, rtol=1e-5, atol=1e-5), (loss2, ref2)

    print("KERNEL_OK")
</pallas_src>

<mosaic_0001>
module attributes {stable_mosaic.version = 11 : i64} {
  func.func @kernel(%arg0: i32, %arg1: i32, %arg2: memref<2xf32, #tpu.memory_space<smem>>, %arg3: memref<16x128xf32, #tpu.memory_space<vmem>>, %arg4: memref<16x128xf32, #tpu.memory_space<vmem>>, %arg5: memref<8x128xf32, #tpu.memory_space<vmem>>) attributes {dimension_semantics = [#tpu.dimension_semantics<parallel>, #tpu.dimension_semantics<arbitrary>], iteration_bounds = array<i64: 1, 1>, scalar_prefetch = 1 : i64, scratch_operands = 0 : i64, tpu.core_type = #tpu.core_type<tc>, window_params = [{transform_indices = @transform_0, window_bounds = array<i64: 16, 128>}, {transform_indices = @transform_1, window_bounds = array<i64: 16, 128>}, {transform_indices = @transform_2, window_bounds = array<i64: 8, 128>}]} {
    %c0_i32 = arith.constant 0 : i32
    %0 = arith.cmpi eq, %arg1, %c0_i32 : i32
    %1 = arith.extui %0 : i1 to i32
    %c0_i32_0 = arith.constant 0 : i32
    %2 = arith.cmpi ne, %1, %c0_i32_0 : i32
    scf.if %2 {
      %cst_12 = arith.constant 0.000000e+00 : f32
      %34 = vector.broadcast %cst_12 : f32 to vector<8x128xf32>
      %c0_13 = arith.constant 0 : index
      %c0_14 = arith.constant 0 : index
      %35 = vector.load %arg5[%c0_13, %c0_14] : memref<8x128xf32, #tpu.memory_space<vmem>>, vector<8x128xf32>
      tpu.vector_store %arg5[%c0_13, %c0_14], %34 {strides = array<i32>} : memref<8x128xf32, #tpu.memory_space<vmem>>, vector<8x128xf32>,
    } else {
    }
    %c0 = arith.constant 0 : index
    %3 = memref.load %arg2[%c0] : memref<2xf32, #tpu.memory_space<smem>>
    %c1 = arith.constant 1 : index
    %4 = memref.load %arg2[%c1] : memref<2xf32, #tpu.memory_space<smem>>
    %cst = arith.constant 0.000000e+00 : f32
    %5 = vector.broadcast %cst : f32 to vector<8x128xf32>
    %c0_i32_1 = arith.constant 0 : i32
    %c16_i32 = arith.constant 16 : i32
    %6 = arith.muli %c0_i32_1, %c16_i32 : i32
    %7 = tpu.assume_multiple %6, 16 : i32
    %8 = arith.index_cast %7 : i32 to index
    %c0_2 = arith.constant 0 : index
    %9 = vector.load %arg3[%8, %c0_2] : memref<16x128xf32, #tpu.memory_space<vmem>>, vector<16x128xf32>
    %10 = arith.index_cast %7 : i32 to index
    %c0_3 = arith.constant 0 : index
    %11 = vector.load %arg4[%10, %c0_3] : memref<16x128xf32, #tpu.memory_space<vmem>>, vector<16x128xf32>
    %12 = vector.broadcast %3 : f32 to vector<16x128xf32>
    %13 = arith.cmpf oge, %11, %12 : vector<16x128xf32>
    %14 = vector.broadcast %4 : f32 to vector<16x128xf32>
    %15 = arith.cmpf ole, %11, %14 : vector<16x128xf32>
    %16 = arith.andi %13, %15 : vector<16x128xi1>
    %cst_4 = arith.constant 0.000000e+00 : f32
    %17 = vector.broadcast %cst_4 : f32 to vector<16x128xf32>
    %18 = arith.maximumf %9, %17 : vector<16x128xf32>
    %cst_5 = arith.constant 0.000000e+00 : f32
    %19 = vector.broadcast %cst_5 : f32 to vector<16x128xf32>
    %20 = arith.select %16, %9, %19 : vector<16x128xi1>, vector<16x128xf32>
    %21 = arith.subf %18, %20 : vector<16x128xf32>
    %22 = math.absf %9 : vector<16x128xf32>
    %cst_6 = arith.constant 0.000000e+00 : f32
    %23 = vector.broadcast %cst_6 : f32 to vector<16x128xf32>
    %24 = arith.subf %23, %22 : vector<16x128xf32>
    %25 = math.exp %24 : vector<16x128xf32>
    %26 = math.log1p %25 : vector<16x128xf32>
    %27 = arith.addf %21, %26 : vector<16x128xf32>
    %28 = vector.shape_cast %27 : vector<16x128xf32> to vector<2x8x128xf32>
    %cst_7 = arith.constant dense<0.000000e+00> : vector<8x128xf32>
    %29 = vector.multi_reduction <add>, %28, %cst_7 [0] : vector<2x8x128xf32> to vector<8x128xf32>
    %30 = arith.addf %5, %29 : vector<8x128xf32>
    %c1_i32 = arith.constant 1 : i32
    %c0_8 = arith.constant 0 : index
    %c0_9 = arith.constant 0 : index
    %31 = vector.load %arg5[%c0_8, %c0_9] : memref<8x128xf32, #tpu.memory_space<vmem>>, vector<8x128xf32>
    %32 = arith.addf %31, %30 : vector<8x128xf32>
    %c0_10 = arith.constant 0 : index
    %c0_11 = arith.constant 0 : index
    %33 = vector.load %arg5[%c0_10, %c0_11] : memref<8x128xf32, #tpu.memory_space<vmem>>, vector<8x128xf32>
    tpu.vector_store %arg5[%c0_10, %c0_11], %32 {strides = array<i32>} : memref<8x128xf32, #tpu.memory_space<vmem>>, vector<8x128xf32>,
    return
  }
  func.func @transform_0(%arg0: i32, %arg1: i32, %arg2: memref<2xf32, #tpu.memory_space<smem>>) -> (i32, i32) {
    %c1_i32 = arith.constant 1 : i32
    %0 = arith.muli %arg0, %c1_i32 : i32
    %1 = arith.addi %0, %arg1 : i32
    %c0_i32 = arith.constant 0 : i32
    %c0_i32_0 = arith.constant 0 : i32
    return %1, %c0_i32 : i32, i32
  }
  func.func @transform_1(%arg0: i32, %arg1: i32, %arg2: memref<2xf32, #tpu.memory_space<smem>>) -> (i32, i32) {
    %c1_i32 = arith.constant 1 : i32
    %0 = arith.muli %arg0, %c1_i32 : i32
    %1 = arith.addi %0, %arg1 : i32
    %c0_i32 = arith.constant 0 : i32
    %c0_i32_0 = arith.constant 0 : i32
    return %1, %c0_i32 : i32, i32
  }
  func.func @transform_2(%arg0: i32, %arg1: i32, %arg2: memref<2xf32, #tpu.memory_space<smem>>) -> (i32, i32) {
    %c0_i32 = arith.constant 0 : i32
    %c0_i32_0 = arith.constant 0 : i32
    return %arg0, %c0_i32 : i32, i32
  }
}

</mosaic_0001>

<llo_original>
// kernel: tpu_custom_call.1
$region0: #{tpu_custom_call.1}
  #allocation0 [shape = 'u32[]', space=smem, size = 0x4, offset = 0x4, fixed_abs, tag = 'smem constant byte address 0x4 - core index']
  #allocation1 [shape = 'u32[72,128]{1,0:T(1,128)}', space=vmem, size = 0x9000, scoped, tag = 'internal scratch']
  #allocation2 [shape = 's32[1]{0}', space=sflag, size = 0x4, scoped, tag = 'scoped memory for tpu_custom_call.1']
  #allocation3 [shape = 'u8[512]{0}', space=smem, size = 0x200, scoped, tag = 'prefetched SMEM operand 0']
  %s0 = inlined_call_operand.hbm [shape: f32[2], index: 0, kind: input, shape index: {}]
  %s1 = inlined_call_operand.hbm [shape: f32[16,128], index: 1, kind: input, shape index: {}]
  %s2 = inlined_call_operand.hbm [shape: f32[16,128], index: 2, kind: input, shape index: {}]
  %s3 = inlined_call_operand.hbm [shape: f32[8,128], index: 3, kind: output, shape index: {}]
  %s4 = sld [smem:[#allocation0]]
  $region30: #{tpu_custom_call.1} parent=0
    _
  %s6 = ssub.s32 1, %s4
  %s7 = scalar_select 0, %s6, %s4
  %s9 = sshll.u32 %s0, 4
  %s10 = int_to_ptr.hbm [resolvable:$true] %s9
  %12 = dma.hbm_to_smem %s10, 16, [#allocation3], [#allocation2]
  %14 = dma.done [#allocation2], 16
  %15 = sfence
  $region1: #{tpu_custom_call.1} parent=0
    #allocation4 [shape = 'u8[8192]{0}', space=vmem, size = 0x2000, scoped, tag = 'input window, operand 1, single buffered']
    #allocation5 [shape = 's32[1]{0}', space=sflag, size = 0x4, scoped, tag = 'scoped memory for tpu_custom_call.1']
    #allocation6 [shape = 's32[1]{0}', space=sflag, size = 0x4, scoped, tag = 'scoped memory for tpu_custom_call.1']
    #allocation7 [shape = 'u8[8192]{0}', space=vmem, size = 0x2000, scoped, tag = 'input window, operand 2, single buffered']
    #allocation8 [shape = 's32[1]{0}', space=sflag, size = 0x4, scoped, tag = 'scoped memory for tpu_custom_call.1']
    #allocation9 [shape = 'u8[4096]{0}', space=vmem, size = 0x1000, scoped, tag = 'output window, operand 0, single buffered']
    %16 = vsyncpa [#allocation5], 0
    %17 = vsyncpa [#allocation8], 0
    %18 = vsyncpa [#allocation6], 0
    // Predicated region
    $region2: #{tpu_custom_call.1} parent=1 // pred_check
      _
    $region3: #{tpu_custom_call.1} parent=1 // pred_check_branch
      %20 = sbr.rel (0) target = $region5
    $region4: #{tpu_custom_call.1} parent=1 // pred_region
      %s21 = sadd.s32 0, 0
      %s22 = smul.u32 2, %s21
      %24 = vsyncadd [#allocation5], 0
      %s25 = smul.addr %s22, 8
      %s26 = scalar_lea.hbm %s1, %s25
      %s27 = sshll.u32 %s26, 4
      %s28 = int_to_ptr.hbm [resolvable:$true] %s27
      %s29 = sshll.u32 [#allocation4], 4
      %s30 = int_to_ptr.vmem [resolvable:$true] %s29
      %35 = dma.hbm_to_vmem [thread:$0]  %s28, 256, %s30, [#allocation5], 128, 128, 8
    $region5: #{tpu_custom_call.1} parent=1 // pred_fallthru
      _
    // Predicated region
    $region6: #{tpu_custom_call.1} parent=1 // pred_check
      _
    $region7: #{tpu_custom_call.1} parent=1 // pred_check_branch
      %37 = sbr.rel (0) target = $region9
    $region8: #{tpu_custom_call.1} parent=1 // pred_region
      %s38 = sadd.s32 0, 0
      %s39 = smul.u32 2, %s38
      %41 = vsyncadd [#allocation8], 0
      %s42 = smul.addr %s39, 8
      %s43 = scalar_lea.hbm %s2, %s42
      %s44 = sshll.u32 %s43, 4
      %s45 = int_to_ptr.hbm [resolvable:$true] %s44
      %s46 = sshll.u32 [#allocation7], 4
      %s47 = int_to_ptr.vmem [resolvable:$true] %s46
      %52 = dma.hbm_to_vmem [thread:$0]  %s45, 256, %s47, [#allocation8], 128, 128, 8
    $region9: #{tpu_custom_call.1} parent=1 // pred_fallthru
      _
    // Predicated region
    $region10: #{tpu_custom_call.1} parent=1 // pred_check
      _
    $region11: #{tpu_custom_call.1} parent=1 // pred_check_branch
      %54 = sbr.rel (0) target = $region13
    $region12: #{tpu_custom_call.1} parent=1 // pred_region
      %56 = dma.done [#allocation5], 256
    $region13: #{tpu_custom_call.1} parent=1 // pred_fallthru
      _
    // Predicated region
    $region14: #{tpu_custom_call.1} parent=1 // pred_check
      _
    $region15: #{tpu_custom_call.1} parent=1 // pred_check_branch
      %58 = sbr.rel (0) target = $region17
    $region16: #{tpu_custom_call.1} parent=1 // pred_region
      %60 = dma.done [#allocation8], 256
    $region17: #{tpu_custom_call.1} parent=1 // pred_fallthru
      _
    %s61 = sadd.s32 0, 0
    %s62 = smul.u32 2, %s61
    %s63 = sadd.s32 0, 0
    %s64 = smul.u32 2, %s63
    %p65 = scmp.eq.s32.totalorder 0, 0
    // Predicated region
    $region18: #{tpu_custom_call.1} parent=1 // pred_check
      %p66 = pneg %p65
    $region19: #{tpu_custom_call.1} parent=1 // pred_check_branch
      %68 = sbr.rel (%p66) target = $region21
    $region20: #{tpu_custom_call.1} parent=1 // pred_region
      %69 = vst [vmem:[#allocation9] sm:$0xff] 0.0
    $region21: #{tpu_custom_call.1} parent=1 // pred_fallthru
      _
    %s70 = sld [smem:[#allocation3]]
    %s71 = sld [smem:[#allocation3 + $0x1]]
    %v72 = vld [vmem:[#allocation4] sm:$0xff]
    %v73 = vld [vmem:[#allocation4 + $0x8] sm:$0xff]
    %v74 = vld [vmem:[#allocation7] sm:$0xff]
    %v75 = vld [vmem:[#allocation7 + $0x8] sm:$0xff]
    %v76 = vstv %s70
    %vm77 = vcmp.ge.f32.partialorder %v74, %v76
    %vm78 = vcmp.ge.f32.partialorder %v75, %v76
    %v79 = vstv %s71
    %vm80 = vcmp.le.f32.partialorder %v74, %v79
    %vm81 = vcmp.le.f32.partialorder %v75, %v79
    %vm82 = vmand %vm77, %vm80
    %vm83 = vmand %vm78, %vm81
    %v84 = vmax.f32 %v72, 0.0
    %v85 = vmax.f32 %v73, 0.0
    %v86 = vsel %vm82, %v72, 0.0
    %v87 = vsel %vm83, %v73, 0.0
    %v88 = vsub.f32 %v84, %v86
    %v89 = vsub.f32 %v85, %v87
    %v90 = vand.u32 2147483647, %v72
    %v91 = vand.u32 2147483647, %v73
    %v92 = vsub.f32 0.0, %v90
    %v93 = vsub.f32 0.0, %v91
    %v94 = vmul.f32 %v92, 1.442695
    %v95 = vpow.pop %v94
    %v96 = vmul.f32 %v93, 1.442695
    %v97 = vpow.pop %v96
    %v98 = vadd.f32 %v95, 1.0
    %v99 = vlog2.pop %v98
    %v100 = vmul.f32 %v99, 0.6931472
    %v101 = vmul.f32 -0.5, %v95
    %v102 = vadd.f32 %v101, 1.0
    %v103 = vmul.f32 %v102, %v95
    %v104 = vand.u32 2147483647, %v95
    %vm105 = vcmp.lt.f32.partialorder %v104, 0.0004427343
    %v106 = vsel %vm105, %v103, %v100
    %v107 = vadd.f32 %v97, 1.0
    %v108 = vlog2.pop %v107
    %v109 = vmul.f32 %v108, 0.6931472
    %v110 = vmul.f32 -0.5, %v97
    %v111 = vadd.f32 %v110, 1.0
    %v112 = vmul.f32 %v111, %v97
    %v113 = vand.u32 2147483647, %v97
    %vm114 = vcmp.lt.f32.partialorder %v113, 0.0004427343
    %v115 = vsel %vm114, %v112, %v109
    %v116 = vadd.f32 %v88, %v106
    %v117 = vadd.f32 %v89, %v115
    %v118 = vadd.f32 %v116, %v117
    %v119 = vadd.f32 %v118, 0.0
    %v120 = vld [vmem:[#allocation9] sm:$0xff]
    %v121 = vadd.f32 %v120, %v119
    %122 = vst [vmem:[#allocation9] sm:$0xff] %v121
    // Predicated region
    $region22: #{tpu_custom_call.1} parent=1 // pred_check
      _
    $region23: #{tpu_custom_call.1} parent=1 // pred_check_branch
      %124 = sbr.rel (0) target = $region25
    $region24: #{tpu_custom_call.1} parent=1 // pred_region
      %126 = vsyncadd [#allocation6], 0
      %s128 = sshll.u32 [#allocation9], 4
      %s129 = int_to_ptr.vmem [resolvable:$true] %s128
      %s130 = sshll.u32 %s3, 4
      %s131 = int_to_ptr.hbm [resolvable:$true] %s130
      %133 = dma.vmem_to_hbm [thread:$0]  %s129, 128, %s131, [#allocation6]
    $region25: #{tpu_custom_call.1} parent=1 // pred_fallthru
      _
    // Predicated region
    $region26: #{tpu_custom_call.1} parent=1 // pred_check
      _
    $region27: #{tpu_custom_call.1} parent=1 // pred_check_branch
      %135 = sbr.rel (0) target = $region29
    $region28: #{tpu_custom_call.1} parent=1 // pred_region
      %137 = dma.done [#allocation6], 128
    $region29: #{tpu_custom_call.1} parent=1 // pred_fallthru
      _
    %138 = vsyncpa [#allocation5], 1
    %139 = vsyncpa [#allocation8], 1
    %140 = vsyncpa [#allocation6], 1

</llo_original>
